<compile_context>
chip_gen: v5e
topology: v5e:2x2
jax: 0.10.0
libtpu: 0.0.40
codegen_flags: <defaults>
</compile_context>

<pallas_src>
import functools

import jax
import jax.numpy as jnp
from jax import lax
from jax.experimental import pallas as pl
from jax.experimental.pallas import tpu as pltpu

_NUM_STATS = 9  # sum p_id/p_age/p_gen, sum squares, sum cross products


def _bccm_kernel(idf_ref, agef_ref, genf_ref, w_ref, out_ref, *,
                 steps_per_core, batch_tile, num_blocks, batch, needs_mask):
    """One (core, batch-tile) grid step: accumulate sufficient statistics.

    idf_ref/agef_ref/genf_ref: [tb, E] feature tiles in native dtype (VMEM)
    w_ref:                     [3, E]  lane-dense packed weights (VMEM, resident)
    out_ref:                   [8, 128] per-core partial-statistics block; it is
                               the accumulator (resident across the inner axis).
    """
    c = pl.program_id(0)   # core / batch-shard index ("parallel")
    i = pl.program_id(1)   # batch-tile index within the shard ("arbitrary")

    @pl.when(i == 0)
    def _init():
        out_ref[...] = jnp.zeros_like(out_ref)

    w = w_ref[...]  # [3, E] f32

    # Upcast immediately after load (v5e has no bf16 VALU); no-op for f32.
    x_id = idf_ref[...].astype(jnp.float32)
    x_age = agef_ref[...].astype(jnp.float32)
    x_gen = genf_ref[...].astype(jnp.float32)

    # N=1 "matvec" as VPU broadcast-multiply + lane reduce -> [tb, 1]; no MXU.
    p_id = jnp.sum(x_id * w[0:1, :], axis=-1, keepdims=True)
    p_age = jnp.sum(x_age * w[1:2, :], axis=-1, keepdims=True)
    p_gen = jnp.sum(x_gen * w[2:3, :], axis=-1, keepdims=True)

    if needs_mask:
        # Mask padded tail rows and fully out-of-range (clamped) blocks.
        blk = c * steps_per_core + i
        row = blk * batch_tile + lax.broadcasted_iota(
            jnp.int32, (batch_tile, 1), 0)
        valid = jnp.logical_and(row < batch, blk < num_blocks)
        zero = jnp.zeros_like(p_id)
        p_id = jnp.where(valid, p_id, zero)
        p_age = jnp.where(valid, p_age, zero)
        p_gen = jnp.where(valid, p_gen, zero)

    stats = (p_id, p_age, p_gen,
             p_id * p_id, p_age * p_age, p_gen * p_gen,
             p_id * p_age, p_id * p_gen, p_age * p_gen)

    # Reduce the nine per-row statistics for this tile and pack them into
    # lanes 0..8 of a single (1, 128) row, then do ONE read-modify-write on the
    # resident output block (instead of nine lane-sparse (1,1) RMWs).  The
    # per-step sublane reductions themselves are hidden under the feature DMA
    # for E >= ~64 (default embedding size is 512).
    lane = lax.broadcasted_iota(jnp.int32, (1, 128), 1)
    upd = jnp.zeros((1, 128), jnp.float32)
    for k, q in enumerate(stats):
        upd = jnp.where(lane == k, jnp.sum(q, axis=0, keepdims=True), upd)
    out_ref[0:1, :] += upd


def _round_up(x, m):
    return ((x + m - 1) // m) * m


def _vmem_capacity_bytes():
    try:
        return int(pltpu.get_tpu_info().vmem_capacity_bytes)
    except Exception:  # not on TPU / field unavailable -> conservative default
        return 128 * 1024 * 1024


def _pick_batch_tile(batch, emb, itemsize, row_align):
    """VMEM- and E-aware batch tile.

    Budgets the double-buffered feature working set (2 buffers x 3 features x
    tb x E x itemsize) at <= ~24 MiB: large enough to amortize the ~0.35 us
    per-grid-step overhead against HBM bandwidth, small enough for v7x's
    64 MiB VMEM (and well inside v5e/v6e's 128 MiB with a raised scoped limit).
    """
    budget = min(24 * 1024 * 1024, _vmem_capacity_bytes() * 3 // 8)
    tb = budget // (2 * 3 * emb * itemsize)
    tb = max(row_align, min(tb, 2048))     # cap keeps [tb,1] vreg pressure sane
    tb = (tb // row_align) * row_align
    tb = min(tb, _round_up(batch, row_align))
    return max(row_align, tb)


def bccm_forward(id_features, age_features, gender_features,
                 w_id, w_age, w_gen, *, batch_tile=None, num_cores=None):
    """BCCM forward.  w_* are the [E, 1] weight columns of the nn.Linear layers."""
    B, E = id_features.shape
    assert age_features.shape == (B, E) and gender_features.shape == (B, E)
    assert w_id.shape == (E, 1) and w_age.shape == (E, 1) and w_gen.shape == (E, 1)
    assert B >= 2, "BCCM requires batch >= 2 (unbiased variance uses B - 1)."

    feat_dtype = id_features.dtype
    itemsize = jnp.dtype(feat_dtype).itemsize
    row_align = max(8, 32 // itemsize)   # 8 rows for f32, 16 for bf16, 32 for 8-bit

    tb = batch_tile if batch_tile is not None else _pick_batch_tile(
        B, E, itemsize, row_align)
    assert tb >= row_align and tb % row_align == 0, (tb, row_align)

    nblocks = -(-B // tb)
    if num_cores is None:
        # Size-2 parallel axis uses both TensorCores on v7x; on 1-TC chips it
        # just loops (neutral).
        num_cores = 2 if nblocks >= 2 else 1
    P = max(1, min(num_cores, nblocks))
    spc = -(-nblocks // P)                       # grid steps per core
    needs_mask = (P * spc * tb != B)

    # Pack the three [E,1] predictor columns lane-dense -> [3, E] (tiny copy,
    # 3*E elements); the block stays VMEM-resident (constant index_map).
    weights = jnp.concatenate([w_id.T, w_age.T, w_gen.T],
                              axis=0).astype(jnp.float32)

    kernel = functools.partial(
        _bccm_kernel, steps_per_core=spc, batch_tile=tb,
        num_blocks=nblocks, batch=B, needs_mask=needs_mask)

    def feat_index(c, i):
        # Clamp so trailing (empty) steps of the last core re-read an in-bounds
        # block; their rows are masked in the kernel, so nothing is counted twice.
        return (jnp.minimum(c * spc + i, nblocks - 1), 0)

    feat_spec = pl.BlockSpec((tb, E), feat_index)
    # TODO(synk): pipeline_mode=pl.Buffered(3) on feat_spec would hide DMA issue
    # latency when tb ends up small (very large E); omitted as a low-value knob.

    feat_dbuf_bytes = 2 * 3 * tb * E * itemsize
    vmem_limit = int(min(_vmem_capacity_bytes() - 8 * 1024 * 1024,
                         max(32 * 1024 * 1024,
                             feat_dbuf_bytes + 16 * 1024 * 1024)))

    cost = pl.CostEstimate(
        flops=2 * 3 * B * E + 15 * B,
        transcendentals=0,
        bytes_accessed=3 * B * E * itemsize + weights.size * 4 + P * 8 * 128 * 4)

    partials = pl.pallas_call(
        kernel,
        out_shape=jax.ShapeDtypeStruct((P * 8, 128), jnp.float32),
        grid_spec=pltpu.PrefetchScalarGridSpec(
            num_scalar_prefetch=0,
            grid=(P, spc),
            in_specs=[
                feat_spec,   # id features, streamed per batch tile
                feat_spec,   # age features
                feat_spec,   # gender features
                pl.BlockSpec((3, E), lambda c, i: (0, 0)),  # resident weights
            ],
            out_specs=pl.BlockSpec((8, 128), lambda c, i: (c, 0)),
        ),
        compiler_params=pltpu.CompilerParams(
            dimension_semantics=("parallel", "arbitrary"),
            vmem_limit_bytes=vmem_limit,
        ),
        cost_estimate=cost,
    )(id_features, age_features, gender_features, weights)

    # Combine per-core partial statistics and finalize (a handful of scalar
    # flops, done in plain JAX).
    stats = partials.reshape(P, 8, 128)[:, 0, :_NUM_STATS].sum(axis=0)
    s_id, s_age, s_gen, q_id, q_age, q_gen, x_ia, x_ig, x_ag = (
        stats[k] for k in range(_NUM_STATS))

    inv_b = 1.0 / B
    inv_bm1 = 1.0 / (B - 1)
    m_id, m_age, m_gen = s_id * inv_b, s_age * inv_b, s_gen * inv_b
    # torch.var default is unbiased (ddof=1): (sum p^2 - B m^2)/(B-1) + eps.
    v_id = (q_id - s_id * m_id) * inv_bm1 + 1e-6
    v_age = (q_age - s_age * m_age) * inv_bm1 + 1e-6
    v_gen = (q_gen - s_gen * m_gen) * inv_bm1 + 1e-6
    # Covariances use the biased 1/B mean (matches the PyTorch reference).
    c_ia = x_ia * inv_b - m_id * m_age
    c_ig = x_ig * inv_b - m_id * m_gen
    c_ag = x_ag * inv_b - m_age * m_gen
    corr = (c_ia * c_ia / (v_age * v_id)
            + c_ig * c_ig / (v_gen * v_id)
            + c_ag * c_ag / (v_age * v_gen)) / 3.0
    # PyTorch returns shape [1] (mean over dim=0 of [B, 1] predictions).
    return corr.reshape(1)


def bccm_reference(id_features, age_features, gender_features,
                   w_id, w_age, w_gen):
    """Pure-JAX reference matching the PyTorch semantics (two-pass stats)."""
    def project(x, w):
        return jnp.sum(x.astype(jnp.float32)
                       * w.astype(jnp.float32)[:, 0][None, :],
                       axis=1, keepdims=True)

    id_pred = project(id_features, w_id)
    age_pred = project(age_features, w_age)
    gen_pred = project(gender_features, w_gen)

    def stats(p):
        return p.mean(axis=0), p.var(axis=0, ddof=1) + 1e-6

    id_m, id_v = stats(id_pred)
    age_m, age_v = stats(age_pred)
    gen_m, gen_v = stats(gen_pred)
    ia = ((age_pred - age_m) * (id_pred - id_m)).mean(axis=0) ** 2 / (age_v * id_v)
    ig = ((gen_pred - gen_m) * (id_pred - id_m)).mean(axis=0) ** 2 / (gen_v * id_v)
    ag = ((age_pred - age_m) * (gen_pred - gen_m)).mean(axis=0) ** 2 / (age_v * gen_v)
    return (ia + ig + ag) / 3.0


def _make_inputs(key, B, E, dtype=jnp.float32):
    k1, k2, k3, k4, k5, k6 = jax.random.split(key, 6)
    idf = jax.random.normal(k1, (B, E), jnp.float32).astype(dtype)
    agef = jax.random.normal(k2, (B, E), jnp.float32).astype(dtype)
    genf = jax.random.normal(k3, (B, E), jnp.float32).astype(dtype)
    bound = 1.0 / (E ** 0.5)
    w_id = jax.random.uniform(k4, (E, 1), jnp.float32, -bound, bound)
    w_age = jax.random.uniform(k5, (E, 1), jnp.float32, -bound, bound)
    w_gen = jax.random.uniform(k6, (E, 1), jnp.float32, -bound, bound)
    return idf, agef, genf, w_id, w_age, w_gen


if __name__ == "__main__":
    key = jax.random.PRNGKey(0)
    k_a, k_b = jax.random.split(key)

    # Case 1: tiny f32 shapes consistent with the module (single grid step).
    args = _make_inputs(k_a, 8, 32)
    out = jax.block_until_ready(bccm_forward(*args))
    ref = bccm_reference(*args)
    assert out.shape == (1,)
    assert jnp.allclose(out, ref, rtol=5e-4, atol=1e-6), (out, ref)

    # Case 2: bf16 features, ragged batch (masked tail rows + clamped empty
    # step), multi-step reduction and the 2-core "parallel" batch split.
    args2 = _make_inputs(k_b, 37, 128, dtype=jnp.bfloat16)
    out2 = jax.block_until_ready(bccm_forward(*args2, batch_tile=16))
    ref2 = bccm_reference(*args2)
    assert out2.shape == (1,)
    assert jnp.allclose(out2, ref2, rtol=5e-4, atol=1e-6), (out2, ref2)

    print("KERNEL_OK")
</pallas_src>

<mosaic_0001>
module attributes {stable_mosaic.version = 11 : i64} {
  func.func @_bccm_kernel(%arg0: i32, %arg1: i32, %arg2: memref<8x32xf32, #tpu.memory_space<vmem>>, %arg3: memref<8x32xf32, #tpu.memory_space<vmem>>, %arg4: memref<8x32xf32, #tpu.memory_space<vmem>>, %arg5: memref<3x32xf32, #tpu.memory_space<vmem>>, %arg6: memref<8x128xf32, #tpu.memory_space<vmem>>) attributes {dimension_semantics = [#tpu.dimension_semantics<parallel>, #tpu.dimension_semantics<arbitrary>], iteration_bounds = array<i64: 1, 1>, scalar_prefetch = 0 : i64, scratch_operands = 0 : i64, tpu.core_type = #tpu.core_type<tc>, window_params = [{transform_indices = @transform_0, window_bounds = array<i64: 8, 32>}, {transform_indices = @transform_1, window_bounds = array<i64: 8, 32>}, {transform_indices = @transform_2, window_bounds = array<i64: 8, 32>}, {pipeline_mode = #tpu.pipeline_mode<synchronous>, transform_indices = @transform_3, window_bounds = array<i64: 3, 32>}, {transform_indices = @transform_4, window_bounds = array<i64: 8, 128>}]} {
    %c0_i32 = arith.constant 0 : i32
    %0 = arith.cmpi eq, %arg1, %c0_i32 : i32
    %1 = arith.extui %0 : i1 to i32
    %c0_i32_0 = arith.constant 0 : i32
    %2 = arith.cmpi ne, %1, %c0_i32_0 : i32
    scf.if %2 {
      %cst_25 = arith.constant 0.000000e+00 : f32
      %96 = vector.broadcast %cst_25 : f32 to vector<8x128xf32>
      %c0_26 = arith.constant 0 : index
      %c0_27 = arith.constant 0 : index
      %97 = vector.load %arg6[%c0_26, %c0_27] : memref<8x128xf32, #tpu.memory_space<vmem>>, vector<8x128xf32>
      tpu.vector_store %arg6[%c0_26, %c0_27], %96 {strides = array<i32>} : memref<8x128xf32, #tpu.memory_space<vmem>>, vector<8x128xf32>,
    } else {
    }
    %c0 = arith.constant 0 : index
    %c0_1 = arith.constant 0 : index
    %3 = vector.load %arg5[%c0, %c0_1] : memref<3x32xf32, #tpu.memory_space<vmem>>, vector<3x32xf32>
    %c0_2 = arith.constant 0 : index
    %c0_3 = arith.constant 0 : index
    %4 = vector.load %arg2[%c0_2, %c0_3] : memref<8x32xf32, #tpu.memory_space<vmem>>, vector<8x32xf32>
    %c0_4 = arith.constant 0 : index
    %c0_5 = arith.constant 0 : index
    %5 = vector.load %arg3[%c0_4, %c0_5] : memref<8x32xf32, #tpu.memory_space<vmem>>, vector<8x32xf32>
    %c0_6 = arith.constant 0 : index
    %c0_7 = arith.constant 0 : index
    %6 = vector.load %arg4[%c0_6, %c0_7] : memref<8x32xf32, #tpu.memory_space<vmem>>, vector<8x32xf32>
    %7 = vector.extract_strided_slice %3 {offsets = [0, 0], sizes = [1, 32], strides = [1, 1]} : vector<3x32xf32> to vector<1x32xf32>
    %8 = vector.broadcast %7 : vector<1x32xf32> to vector<8x32xf32>
    %9 = arith.mulf %4, %8 : vector<8x32xf32>
    %cst = arith.constant dense<0.000000e+00> : vector<8xf32>
    %10 = vector.multi_reduction <add>, %9, %cst [1] : vector<8x32xf32> to vector<8xf32>
    %11 = vector.shape_cast %10 : vector<8xf32> to vector<8x1xf32>
    %12 = vector.extract_strided_slice %3 {offsets = [1, 0], sizes = [1, 32], strides = [1, 1]} : vector<3x32xf32> to vector<1x32xf32>
    %13 = vector.broadcast %12 : vector<1x32xf32> to vector<8x32xf32>
    %14 = arith.mulf %5, %13 : vector<8x32xf32>
    %cst_8 = arith.constant dense<0.000000e+00> : vector<8xf32>
    %15 = vector.multi_reduction <add>, %14, %cst_8 [1] : vector<8x32xf32> to vector<8xf32>
    %16 = vector.shape_cast %15 : vector<8xf32> to vector<8x1xf32>
    %17 = vector.extract_strided_slice %3 {offsets = [2, 0], sizes = [1, 32], strides = [1, 1]} : vector<3x32xf32> to vector<1x32xf32>
    %18 = vector.broadcast %17 : vector<1x32xf32> to vector<8x32xf32>
    %19 = arith.mulf %6, %18 : vector<8x32xf32>
    %cst_9 = arith.constant dense<0.000000e+00> : vector<8xf32>
    %20 = vector.multi_reduction <add>, %19, %cst_9 [1] : vector<8x32xf32> to vector<8xf32>
    %21 = vector.shape_cast %20 : vector<8xf32> to vector<8x1xf32>
    %22 = arith.mulf %11, %11 : vector<8x1xf32>
    %23 = arith.mulf %16, %16 : vector<8x1xf32>
    %24 = arith.mulf %21, %21 : vector<8x1xf32>
    %25 = arith.mulf %11, %16 : vector<8x1xf32>
    %26 = arith.mulf %11, %21 : vector<8x1xf32>
    %27 = arith.mulf %16, %21 : vector<8x1xf32>
    %28 = tpu.iota {dimensions = array<i32: 1>} : vector<1x128xi32>
    %cst_10 = arith.constant 0.000000e+00 : f32
    %29 = vector.broadcast %cst_10 : f32 to vector<1x128xf32>
    %c0_i32_11 = arith.constant 0 : i32
    %30 = vector.broadcast %c0_i32_11 : i32 to vector<1x128xi32>
    %31 = arith.cmpi eq, %28, %30 : vector<1x128xi32>
    %cst_12 = arith.constant dense<0.000000e+00> : vector<1xf32>
    %32 = vector.multi_reduction <add>, %11, %cst_12 [0] : vector<8x1xf32> to vector<1xf32>
    %33 = vector.shape_cast %32 : vector<1xf32> to vector<1x1xf32>
    %34 = vector.shape_cast %33 : vector<1x1xf32> to vector<1x1xf32>
    %35 = vector.broadcast %34 : vector<1x1xf32> to vector<1x128xf32>
    %36 = arith.select %31, %35, %29 : vector<1x128xi1>, vector<1x128xf32>
    %c1_i32 = arith.constant 1 : i32
    %37 = vector.broadcast %c1_i32 : i32 to vector<1x128xi32>
    %38 = arith.cmpi eq, %28, %37 : vector<1x128xi32>
    %cst_13 = arith.constant dense<0.000000e+00> : vector<1xf32>
    %39 = vector.multi_reduction <add>, %16, %cst_13 [0] : vector<8x1xf32> to vector<1xf32>
    %40 = vector.shape_cast %39 : vector<1xf32> to vector<1x1xf32>
    %41 = vector.shape_cast %40 : vector<1x1xf32> to vector<1x1xf32>
    %42 = vector.broadcast %41 : vector<1x1xf32> to vector<1x128xf32>
    %43 = arith.select %38, %42, %36 : vector<1x128xi1>, vector<1x128xf32>
    %c2_i32 = arith.constant 2 : i32
    %44 = vector.broadcast %c2_i32 : i32 to vector<1x128xi32>
    %45 = arith.cmpi eq, %28, %44 : vector<1x128xi32>
    %cst_14 = arith.constant dense<0.000000e+00> : vector<1xf32>
    %46 = vector.multi_reduction <add>, %21, %cst_14 [0] : vector<8x1xf32> to vector<1xf32>
    %47 = vector.shape_cast %46 : vector<1xf32> to vector<1x1xf32>
    %48 = vector.shape_cast %47 : vector<1x1xf32> to vector<1x1xf32>
    %49 = vector.broadcast %48 : vector<1x1xf32> to vector<1x128xf32>
    %50 = arith.select %45, %49, %43 : vector<1x128xi1>, vector<1x128xf32>
    %c3_i32 = arith.constant 3 : i32
    %51 = vector.broadcast %c3_i32 : i32 to vector<1x128xi32>
    %52 = arith.cmpi eq, %28, %51 : vector<1x128xi32>
    %cst_15 = arith.constant dense<0.000000e+00> : vector<1xf32>
    %53 = vector.multi_reduction <add>, %22, %cst_15 [0] : vector<8x1xf32> to vector<1xf32>
    %54 = vector.shape_cast %53 : vector<1xf32> to vector<1x1xf32>
    %55 = vector.shape_cast %54 : vector<1x1xf32> to vector<1x1xf32>
    %56 = vector.broadcast %55 : vector<1x1xf32> to vector<1x128xf32>
    %57 = arith.select %52, %56, %50 : vector<1x128xi1>, vector<1x128xf32>
    %c4_i32 = arith.constant 4 : i32
    %58 = vector.broadcast %c4_i32 : i32 to vector<1x128xi32>
    %59 = arith.cmpi eq, %28, %58 : vector<1x128xi32>
    %cst_16 = arith.constant dense<0.000000e+00> : vector<1xf32>
    %60 = vector.multi_reduction <add>, %23, %cst_16 [0] : vector<8x1xf32> to vector<1xf32>
    %61 = vector.shape_cast %60 : vector<1xf32> to vector<1x1xf32>
    %62 = vector.shape_cast %61 : vector<1x1xf32> to vector<1x1xf32>
    %63 = vector.broadcast %62 : vector<1x1xf32> to vector<1x128xf32>
    %64 = arith.select %59, %63, %57 : vector<1x128xi1>, vector<1x128xf32>
    %c5_i32 = arith.constant 5 : i32
    %65 = vector.broadcast %c5_i32 : i32 to vector<1x128xi32>
    %66 = arith.cmpi eq, %28, %65 : vector<1x128xi32>
    %cst_17 = arith.constant dense<0.000000e+00> : vector<1xf32>
    %67 = vector.multi_reduction <add>, %24, %cst_17 [0] : vector<8x1xf32> to vector<1xf32>
    %68 = vector.shape_cast %67 : vector<1xf32> to vector<1x1xf32>
    %69 = vector.shape_cast %68 : vector<1x1xf32> to vector<1x1xf32>
    %70 = vector.broadcast %69 : vector<1x1xf32> to vector<1x128xf32>
    %71 = arith.select %66, %70, %64 : vector<1x128xi1>, vector<1x128xf32>
    %c6_i32 = arith.constant 6 : i32
    %72 = vector.broadcast %c6_i32 : i32 to vector<1x128xi32>
    %73 = arith.cmpi eq, %28, %72 : vector<1x128xi32>
    %cst_18 = arith.constant dense<0.000000e+00> : vector<1xf32>
    %74 = vector.multi_reduction <add>, %25, %cst_18 [0] : vector<8x1xf32> to vector<1xf32>
    %75 = vector.shape_cast %74 : vector<1xf32> to vector<1x1xf32>
    %76 = vector.shape_cast %75 : vector<1x1xf32> to vector<1x1xf32>
    %77 = vector.broadcast %76 : vector<1x1xf32> to vector<1x128xf32>
    %78 = arith.select %73, %77, %71 : vector<1x128xi1>, vector<1x128xf32>
    %c7_i32 = arith.constant 7 : i32
    %79 = vector.broadcast %c7_i32 : i32 to vector<1x128xi32>
    %80 = arith.cmpi eq, %28, %79 : vector<1x128xi32>
    %cst_19 = arith.constant dense<0.000000e+00> : vector<1xf32>
    %81 = vector.multi_reduction <add>, %26, %cst_19 [0] : vector<8x1xf32> to vector<1xf32>
    %82 = vector.shape_cast %81 : vector<1xf32> to vector<1x1xf32>
    %83 = vector.shape_cast %82 : vector<1x1xf32> to vector<1x1xf32>
    %84 = vector.broadcast %83 : vector<1x1xf32> to vector<1x128xf32>
    %85 = arith.select %80, %84, %78 : vector<1x128xi1>, vector<1x128xf32>
    %c8_i32 = arith.constant 8 : i32
    %86 = vector.broadcast %c8_i32 : i32 to vector<1x128xi32>
    %87 = arith.cmpi eq, %28, %86 : vector<1x128xi32>
    %cst_20 = arith.constant dense<0.000000e+00> : vector<1xf32>
    %88 = vector.multi_reduction <add>, %27, %cst_20 [0] : vector<8x1xf32> to vector<1xf32>
    %89 = vector.shape_cast %88 : vector<1xf32> to vector<1x1xf32>
    %90 = vector.shape_cast %89 : vector<1x1xf32> to vector<1x1xf32>
    %91 = vector.broadcast %90 : vector<1x1xf32> to vector<1x128xf32>
    %92 = arith.select %87, %91, %85 : vector<1x128xi1>, vector<1x128xf32>
    %c0_21 = arith.constant 0 : index
    %c0_22 = arith.constant 0 : index
    %93 = vector.load %arg6[%c0_21, %c0_22] : memref<8x128xf32, #tpu.memory_space<vmem>>, vector<1x128xf32>
    %94 = arith.addf %93, %92 : vector<1x128xf32>
    %c0_23 = arith.constant 0 : index
    %c0_24 = arith.constant 0 : index
    %95 = vector.load %arg6[%c0_23, %c0_24] : memref<8x128xf32, #tpu.memory_space<vmem>>, vector<1x128xf32>
    tpu.vector_store %arg6[%c0_23, %c0_24], %94 {strides = array<i32>} : memref<8x128xf32, #tpu.memory_space<vmem>>, vector<1x128xf32>,
    return
  }
  func.func @transform_0(%arg0: i32, %arg1: i32) -> (i32, i32) {
    %c1_i32 = arith.constant 1 : i32
    %0 = arith.muli %arg0, %c1_i32 : i32
    %1 = arith.addi %0, %arg1 : i32
    %c0_i32 = arith.constant 0 : i32
    %2 = arith.minsi %1, %c0_i32 : i32
    %c0_i32_0 = arith.constant 0 : i32
    %c0_i32_1 = arith.constant 0 : i32
    return %2, %c0_i32_0 : i32, i32
  }
  func.func @transform_1(%arg0: i32, %arg1: i32) -> (i32, i32) {
    %c1_i32 = arith.constant 1 : i32
    %0 = arith.muli %arg0, %c1_i32 : i32
    %1 = arith.addi %0, %arg1 : i32
    %c0_i32 = arith.constant 0 : i32
    %2 = arith.minsi %1, %c0_i32 : i32
    %c0_i32_0 = arith.constant 0 : i32
    %c0_i32_1 = arith.constant 0 : i32
    return %2, %c0_i32_0 : i32, i32
  }
  func.func @transform_2(%arg0: i32, %arg1: i32) -> (i32, i32) {
    %c1_i32 = arith.constant 1 : i32
    %0 = arith.muli %arg0, %c1_i32 : i32
    %1 = arith.addi %0, %arg1 : i32
    %c0_i32 = arith.constant 0 : i32
    %2 = arith.minsi %1, %c0_i32 : i32
    %c0_i32_0 = arith.constant 0 : i32
    %c0_i32_1 = arith.constant 0 : i32
    return %2, %c0_i32_0 : i32, i32
  }
  func.func @transform_3(%arg0: i32, %arg1: i32) -> (i32, i32) {
    %c0_i32 = arith.constant 0 : i32
    %c0_i32_0 = arith.constant 0 : i32
    %c0_i32_1 = arith.constant 0 : i32
    return %c0_i32, %c0_i32_0 : i32, i32
  }
  func.func @transform_4(%arg0: i32, %arg1: i32) -> (i32, i32) {
    %c0_i32 = arith.constant 0 : i32
    %c0_i32_0 = arith.constant 0 : i32
    return %arg0, %c0_i32 : i32, i32
  }
}

</mosaic_0001>

<llo_original>
// kernel: tpu_custom_call.1
$region0: #{tpu_custom_call.1}
  #allocation0 [shape = 'u32[]', space=smem, size = 0x4, offset = 0x4, fixed_abs, tag = 'smem constant byte address 0x4 - core index']
  #allocation1 [shape = 'u32[72,128]{1,0:T(1,128)}', space=vmem, size = 0x9000, scoped, tag = 'internal scratch']
  %s0 = inlined_call_operand.hbm [shape: f32[8,32], index: 0, kind: input, shape index: {}]
  %s1 = inlined_call_operand.hbm [shape: f32[8,32], index: 1, kind: input, shape index: {}]
  %s2 = inlined_call_operand.hbm [shape: f32[8,32], index: 2, kind: input, shape index: {}]
  %s3 = inlined_call_operand.hbm [shape: f32[3,32], index: 3, kind: input, shape index: {}]
  %s4 = inlined_call_operand.hbm [shape: f32[8,128], index: 4, kind: output, shape index: {}]
  %s5 = sld [smem:[#allocation0]]
  $region46: #{tpu_custom_call.1} parent=0
    _
  %s7 = ssub.s32 1, %s5
  %s8 = scalar_select 0, %s7, %s5
  $region1: #{tpu_custom_call.1} parent=0
    #allocation2 [shape = 'u8[4096]{0}', space=vmem, size = 0x1000, scoped, tag = 'input window, operand 0, single buffered']
    #allocation3 [shape = 's32[1]{0}', space=sflag, size = 0x4, scoped, tag = 'scoped memory for tpu_custom_call.1']
    #allocation4 [shape = 's32[1]{0}', space=sflag, size = 0x4, scoped, tag = 'scoped memory for tpu_custom_call.1']
    #allocation5 [shape = 'u8[4096]{0}', space=vmem, size = 0x1000, scoped, tag = 'input window, operand 1, single buffered']
    #allocation6 [shape = 's32[1]{0}', space=sflag, size = 0x4, scoped, tag = 'scoped memory for tpu_custom_call.1']
    #allocation7 [shape = 'u8[4096]{0}', space=vmem, size = 0x1000, scoped, tag = 'input window, operand 2, single buffered']
    #allocation8 [shape = 'u8[2048]{0}', space=vmem, size = 0x800, scoped, tag = 'input window, operand 3, single buffered']
    #allocation9 [shape = 's32[1]{0}', space=sflag, size = 0x4, scoped, tag = 'scoped memory for tpu_custom_call.1']
    #allocation10 [shape = 'u8[4096]{0}', space=vmem, size = 0x1000, scoped, tag = 'output window, operand 0, single buffered']
    %9 = vsyncpa [#allocation3], 0
    %10 = vsyncpa [#allocation6], 0
    %11 = vsyncpa [#allocation9], 0
    %12 = vsyncpa [#allocation4], 0
    // Predicated region
    $region2: #{tpu_custom_call.1} parent=1 // pred_check
      _
    $region3: #{tpu_custom_call.1} parent=1 // pred_check_branch
      %14 = sbr.rel (0) target = $region5
    $region4: #{tpu_custom_call.1} parent=1 // pred_region
      %s15 = sadd.s32 0, 0
      %p16 = scmp.lt.s32.totalorder %s15, 0
      %s17 = scalar_select %p16, %s15, 0
      %19 = vsyncadd [#allocation3], 0
      %s20 = smul.addr %s17, 8
      %s21 = scalar_lea.hbm %s0, %s20
      %s23 = sshll.u32 %s21, 4
      %s24 = int_to_ptr.hbm [resolvable:$true] %s23
      %s25 = sshll.u32 [#allocation2], 4
      %s26 = int_to_ptr.vmem [resolvable:$true] %s25
      %28 = dma.hbm_to_vmem [thread:$0]  %s24, 128, %s26, [#allocation3]
    $region5: #{tpu_custom_call.1} parent=1 // pred_fallthru
      _
    // Predicated region
    $region6: #{tpu_custom_call.1} parent=1 // pred_check
      _
    $region7: #{tpu_custom_call.1} parent=1 // pred_check_branch
      %30 = sbr.rel (0) target = $region9
    $region8: #{tpu_custom_call.1} parent=1 // pred_region
      %s31 = sadd.s32 0, 0
      %p32 = scmp.lt.s32.totalorder %s31, 0
      %s33 = scalar_select %p32, %s31, 0
      %35 = vsyncadd [#allocation6], 0
      %s36 = smul.addr %s33, 8
      %s37 = scalar_lea.hbm %s1, %s36
      %s39 = sshll.u32 %s37, 4
      %s40 = int_to_ptr.hbm [resolvable:$true] %s39
      %s41 = sshll.u32 [#allocation5], 4
      %s42 = int_to_ptr.vmem [resolvable:$true] %s41
      %44 = dma.hbm_to_vmem [thread:$0]  %s40, 128, %s42, [#allocation6]
    $region9: #{tpu_custom_call.1} parent=1 // pred_fallthru
      _
    // Predicated region
    $region10: #{tpu_custom_call.1} parent=1 // pred_check
      _
    $region11: #{tpu_custom_call.1} parent=1 // pred_check_branch
      %46 = sbr.rel (0) target = $region13
    $region12: #{tpu_custom_call.1} parent=1 // pred_region
      %s47 = sadd.s32 0, 0
      %p48 = scmp.lt.s32.totalorder %s47, 0
      %s49 = scalar_select %p48, %s47, 0
      %51 = vsyncadd [#allocation6], 0
      %s52 = smul.addr %s49, 8
      %s53 = scalar_lea.hbm %s2, %s52
      %s55 = sshll.u32 %s53, 4
      %s56 = int_to_ptr.hbm [resolvable:$true] %s55
      %s57 = sshll.u32 [#allocation7], 4
      %s58 = int_to_ptr.vmem [resolvable:$true] %s57
      %60 = dma.hbm_to_vmem [thread:$0]  %s56, 128, %s58, [#allocation6]
    $region13: #{tpu_custom_call.1} parent=1 // pred_fallthru
      _
    // Predicated region
    $region14: #{tpu_custom_call.1} parent=1 // pred_check
      _
    $region15: #{tpu_custom_call.1} parent=1 // pred_check_branch
      %62 = sbr.rel (0) target = $region17
    $region16: #{tpu_custom_call.1} parent=1 // pred_region
      %64 = vsyncadd [#allocation9], 0
      %s66 = sshll.u32 %s3, 4
      %s67 = int_to_ptr.hbm [resolvable:$true] %s66
      %s68 = sshll.u32 [#allocation8], 4
      %s69 = int_to_ptr.vmem [resolvable:$true] %s68
      %71 = dma.hbm_to_vmem [thread:$0]  %s67, 64, %s69, [#allocation9]
    $region17: #{tpu_custom_call.1} parent=1 // pred_fallthru
      _
    // Predicated region
    $region18: #{tpu_custom_call.1} parent=1 // pred_check
      _
    $region19: #{tpu_custom_call.1} parent=1 // pred_check_branch
      %73 = sbr.rel (0) target = $region21
    $region20: #{tpu_custom_call.1} parent=1 // pred_region
      %75 = dma.done [#allocation3], 128
    $region21: #{tpu_custom_call.1} parent=1 // pred_fallthru
      _
    // Predicated region
    $region22: #{tpu_custom_call.1} parent=1 // pred_check
      _
    $region23: #{tpu_custom_call.1} parent=1 // pred_check_branch
      %77 = sbr.rel (0) target = $region25
    $region24: #{tpu_custom_call.1} parent=1 // pred_region
      %79 = dma.done [#allocation6], 128
    $region25: #{tpu_custom_call.1} parent=1 // pred_fallthru
      _
    // Predicated region
    $region26: #{tpu_custom_call.1} parent=1 // pred_check
      _
    $region27: #{tpu_custom_call.1} parent=1 // pred_check_branch
      %81 = sbr.rel (0) target = $region29
    $region28: #{tpu_custom_call.1} parent=1 // pred_region
      %83 = dma.done [#allocation6], 128
    $region29: #{tpu_custom_call.1} parent=1 // pred_fallthru
      _
    // Predicated region
    $region30: #{tpu_custom_call.1} parent=1 // pred_check
      _
    $region31: #{tpu_custom_call.1} parent=1 // pred_check_branch
      %85 = sbr.rel (0) target = $region33
    $region32: #{tpu_custom_call.1} parent=1 // pred_region
      %87 = dma.done [#allocation9], 64
    $region33: #{tpu_custom_call.1} parent=1 // pred_fallthru
      _
    %s88 = sadd.s32 0, 0
    %p89 = scmp.lt.s32.totalorder %s88, 0
    %s90 = scalar_select %p89, %s88, 0
    %s91 = sadd.s32 0, 0
    %p92 = scmp.lt.s32.totalorder %s91, 0
    %s93 = scalar_select %p92, %s91, 0
    %s94 = sadd.s32 0, 0
    %p95 = scmp.lt.s32.totalorder %s94, 0
    %s96 = scalar_select %p95, %s94, 0
    %p97 = scmp.eq.s32.totalorder 0, 0
    // Predicated region
    $region34: #{tpu_custom_call.1} parent=1 // pred_check
      %p98 = pneg %p97
    $region35: #{tpu_custom_call.1} parent=1 // pred_check_branch
      %100 = sbr.rel (%p98) target = $region37
    $region36: #{tpu_custom_call.1} parent=1 // pred_region
      %101 = vst [vmem:[#allocation10] sm:$0xff] 0.0
    $region37: #{tpu_custom_call.1} parent=1 // pred_fallthru
      _
    %v102 = vld [vmem:[#allocation8] sm:$0x7]
    %v103 = vld [vmem:[#allocation2] sm:$0xff]
    %v104 = vld [vmem:[#allocation5] sm:$0xff]
    %v105 = vld [vmem:[#allocation7] sm:$0xff]
    %v106 = vperm.slane %v102, 0
    %v107 = vmul.f32 %v103, %v106
    %vm108 = vcmask 261120
    %v109 = vsel %vm108, %v107, 0.0
    %110 = vadd.xlane.f32.xlu0 %v109
    %v111 = vpop.xlane.xlu0 %110
    %v112 = vperm.slane %v102, 1
    %v113 = vmul.f32 %v104, %v112
    %v114 = vsel %vm108, %v113, 0.0
    %115 = vadd.xlane.f32.xlu0 %v114
    %v116 = vpop.xlane.xlu0 %115
    %v117 = vperm.slane %v102, 2
    %v118 = vmul.f32 %v105, %v117
    %v119 = vsel %vm108, %v118, 0.0
    %120 = vadd.xlane.f32.xlu0 %v119
    %v121 = vpop.xlane.xlu0 %120
    %v122 = vmul.f32 %v111, %v111
    %v123 = vmul.f32 %v116, %v116
    %v124 = vmul.f32 %v121, %v121
    %v125 = vmul.f32 %v111, %v116
    %v126 = vmul.f32 %v111, %v121
    %v127 = vmul.f32 %v116, %v121
    %v128 = vlaneseq
    %v129 = vand.u32 %v128, 127
    %vm130 = vcmp.eq.s32.totalorder %v129, 0
    %v131 = vrot.slane %v111, 4
    %v132 = vadd.f32 %v111, %v131
    %v133 = vrot.slane %v132, 2
    %v134 = vadd.f32 %v132, %v133
    %v135 = vrot.slane %v134, 1
    %v136 = vadd.f32 %v134, %v135
    %v137 = vsel %vm130, %v136, 0.0
    %vm138 = vcmp.eq.s32.totalorder %v129, 1
    %v139 = vrot.slane %v116, 4
    %v140 = vadd.f32 %v116, %v139
    %v141 = vrot.slane %v140, 2
    %v142 = vadd.f32 %v140, %v141
    %v143 = vrot.slane %v142, 1
    %v144 = vadd.f32 %v142, %v143
    %v145 = vsel %vm138, %v144, %v137
    %vm146 = vcmp.eq.s32.totalorder %v129, 2
    %v147 = vrot.slane %v121, 4
    %v148 = vadd.f32 %v121, %v147
    %v149 = vrot.slane %v148, 2
    %v150 = vadd.f32 %v148, %v149
    %v151 = vrot.slane %v150, 1
    %v152 = vadd.f32 %v150, %v151
    %v153 = vsel %vm146, %v152, %v145
    %vm154 = vcmp.eq.s32.totalorder %v129, 3
    %v155 = vrot.slane %v122, 4
    %v156 = vadd.f32 %v122, %v155
    %v157 = vrot.slane %v156, 2
    %v158 = vadd.f32 %v156, %v157
    %v159 = vrot.slane %v158, 1
    %v160 = vadd.f32 %v158, %v159
    %v161 = vsel %vm154, %v160, %v153
    %vm162 = vcmp.eq.s32.totalorder %v129, 4
    %v163 = vrot.slane %v123, 4
    %v164 = vadd.f32 %v123, %v163
    %v165 = vrot.slane %v164, 2
    %v166 = vadd.f32 %v164, %v165
    %v167 = vrot.slane %v166, 1
    %v168 = vadd.f32 %v166, %v167
    %v169 = vsel %vm162, %v168, %v161
    %vm170 = vcmp.eq.s32.totalorder %v129, 5
    %v171 = vrot.slane %v124, 4
    %v172 = vadd.f32 %v124, %v171
    %v173 = vrot.slane %v172, 2
    %v174 = vadd.f32 %v172, %v173
    %v175 = vrot.slane %v174, 1
    %v176 = vadd.f32 %v174, %v175
    %v177 = vsel %vm170, %v176, %v169
    %vm178 = vcmp.eq.s32.totalorder %v129, 6
    %v179 = vrot.slane %v125, 4
    %v180 = vadd.f32 %v125, %v179
    %v181 = vrot.slane %v180, 2
    %v182 = vadd.f32 %v180, %v181
    %v183 = vrot.slane %v182, 1
    %v184 = vadd.f32 %v182, %v183
    %v185 = vsel %vm178, %v184, %v177
    %vm186 = vcmp.eq.s32.totalorder %v129, 7
    %v187 = vrot.slane %v126, 4
    %v188 = vadd.f32 %v126, %v187
    %v189 = vrot.slane %v188, 2
    %v190 = vadd.f32 %v188, %v189
    %v191 = vrot.slane %v190, 1
    %v192 = vadd.f32 %v190, %v191
    %v193 = vsel %vm186, %v192, %v185
    %vm194 = vcmp.eq.s32.totalorder %v129, 8
    %v195 = vrot.slane %v127, 4
    %v196 = vadd.f32 %v127, %v195
    %v197 = vrot.slane %v196, 2
    %v198 = vadd.f32 %v196, %v197
    %v199 = vrot.slane %v198, 1
    %v200 = vadd.f32 %v198, %v199
    %v201 = vsel %vm194, %v200, %v193
    %v202 = vld [vmem:[#allocation10] sm:$0x1]
    %v203 = vadd.f32 %v202, %v201
    %204 = vst [vmem:[#allocation10] sm:$0x1] %v203
    // Predicated region
    $region38: #{tpu_custom_call.1} parent=1 // pred_check
      _
    $region39: #{tpu_custom_call.1} parent=1 // pred_check_branch
      %206 = sbr.rel (0) target = $region41
    $region40: #{tpu_custom_call.1} parent=1 // pred_region
      %208 = vsyncadd [#allocation4], 0
      %s210 = sshll.u32 [#allocation10], 4
      %s211 = int_to_ptr.vmem [resolvable:$true] %s210
      %s212 = sshll.u32 %s4, 4
      %s213 = int_to_ptr.hbm [resolvable:$true] %s212
      %215 = dma.vmem_to_hbm [thread:$0]  %s211, 128, %s213, [#allocation4]
    $region41: #{tpu_custom_call.1} parent=1 // pred_fallthru
      _
    // Predicated region
    $region42: #{tpu_custom_call.1} parent=1 // pred_check
      _
    $region43: #{tpu_custom_call.1} parent=1 // pred_check_branch
      %217 = sbr.rel (0) target = $region45
    $region44: #{tpu_custom_call.1} parent=1 // pred_region
      %219 = dma.done [#allocation4], 128
    $region45: #{tpu_custom_call.1} parent=1 // pred_fallthru
      _
    %220 = vsyncpa [#allocation3], 1
    %221 = vsyncpa [#allocation6], 1
    %222 = vsyncpa [#allocation9], 1
    %223 = vsyncpa [#allocation4], 1

</llo_original>
